<compile_context>
chip_gen: v7x
topology: tpu7x:2x2x1
jax: 0.10.0
libtpu: 0.0.40
codegen_flags: <defaults>
</compile_context>

<pallas_src>
import jax
import jax.numpy as jnp
from jax import lax
from jax.experimental import pallas as pl
from jax.experimental.pallas import tpu as pltpu

NUM_CLASSES = 6
C_PAD = 128  # lane-dense classifier width (sliced back to NUM_CLASSES in the wrapper)


def rnn_classify_kernel(pre_ref, whh_ref, wb_ref, out_ref):
    """Elman RNN recurrence (input projection pre-folded) + final linear classifier.

    pre_ref: (L, B, D) f32   x_t @ W_ih^T + b_ih + b_hh, time-major, B padded to /8
    whh_ref: (D, D)    bf16  W_hh^T  (so h @ whh matches PyTorch h @ W_hh.T)
    wb_ref:  (R, C_PAD) f32  rows [0:D] = W_cls^T (lane-padded), row D = b_cls, rest 0
    out_ref: (B, C_PAD) f32  padded logits
    """
    L, B, D = pre_ref.shape
    whh = whh_ref[...]                      # bf16, loaded once (loop-invariant)

    h0 = jnp.zeros((B, D), jnp.float32)

    def step(t, h):
        # Only the recurrent matmul + tanh remain on the serial dependency chain.
        # bf16 operands -> single-pass MXU; accumulate + tanh in f32.
        acc = jnp.dot(h.astype(jnp.bfloat16), whh,
                      preferred_element_type=jnp.float32)
        return jnp.tanh(pre_ref[t] + acc)

    # L is static and small -> fully unroll so the scheduler can overlap
    # address math / EUP tanh with the MXU pop of each step.
    # TODO(synk): latch W_hh in the MXU weight registers (pltpu.matmul_push_rhs /
    # matmul_acc_lhs / matmul_pop) to drop the per-step weight push; kept as jnp.dot
    # here to avoid generation-specific result-path handling (FIFO v5e/v6e vs MRB v7x).
    h_last = lax.fori_loop(0, L, step, h0, unroll=True)   # == rnn_out[:, -1, :]

    wcls = wb_ref[:D, :].astype(jnp.bfloat16)   # (D, C_PAD) bf16 MXU operand
    bcls = wb_ref[D:D + 1, :]                   # (1, C_PAD) f32 bias
    logits = jnp.dot(h_last.astype(jnp.bfloat16), wcls,
                     preferred_element_type=jnp.float32) + bcls
    out_ref[...] = logits.astype(out_ref.dtype)


def init_params(key, vocab_size, vector_dim, num_classes=NUM_CLASSES):
    ks = jax.random.split(key, 7)
    scale = 0.1
    emb = scale * jax.random.normal(ks[0], (vocab_size, vector_dim), jnp.float32)
    emb = emb.at[0].set(0.0)                     # padding_idx=0
    w_ih = scale * jax.random.normal(ks[1], (vector_dim, vector_dim), jnp.float32)  # (hidden, input)
    w_hh = scale * jax.random.normal(ks[2], (vector_dim, vector_dim), jnp.float32)  # (hidden, hidden)
    b_ih = scale * jax.random.normal(ks[3], (vector_dim,), jnp.float32)
    b_hh = scale * jax.random.normal(ks[4], (vector_dim,), jnp.float32)
    w_cls = scale * jax.random.normal(ks[5], (num_classes, vector_dim), jnp.float32)  # (out, in)
    b_cls = scale * jax.random.normal(ks[6], (num_classes,), jnp.float32)
    return dict(embedding=emb, w_ih=w_ih, w_hh=w_hh, b_ih=b_ih, b_hh=b_hh,
                w_cls=w_cls, b_cls=b_cls)


def torch_model_forward(token_ids, params):
    """token_ids: (B, L) int32  ->  logits: (B, NUM_CLASSES) float32"""
    B, L = token_ids.shape
    D = params["embedding"].shape[1]
    C = NUM_CLASSES
    B_pad = max(8, ((B + 7) // 8) * 8)           # sublane-dense batch

    # Fold the input projection + both biases into the (tiny) embedding table once,
    # then gather: pre[t] = x_t @ W_ih^T + b_ih + b_hh.  (Glue stays in plain JAX.)
    bias = (params["b_ih"] + params["b_hh"]).reshape(1, D)
    proj_emb = jnp.dot(params["embedding"], params["w_ih"].T,
                       precision=jax.lax.Precision.HIGHEST,
                       preferred_element_type=jnp.float32) + bias   # (V, D)
    pre = proj_emb[token_ids]                    # (B, L, D)
    pre = jnp.transpose(pre, (1, 0, 2))          # (L, B, D) time-major
    pre = jnp.pad(pre, ((0, 0), (0, B_pad - B), (0, 0)))   # pad batch -> multiple of 8

    whh_t = params["w_hh"].T.astype(jnp.bfloat16)           # (D, D) bf16 MXU operand

    # Single combined classifier constant: rows [0:D] = W_cls^T (zero-padded to 128
    # lanes), row D = b_cls, remaining rows zero (row count padded to a multiple of 8).
    R = ((D + 1 + 7) // 8) * 8
    wb = jnp.zeros((R, C_PAD), jnp.float32)
    wb = wb.at[:D, :C].set(params["w_cls"].T)
    wb = wb.at[D, :C].set(params["b_cls"])

    vmem = pl.BlockSpec(memory_space=pltpu.MemorySpace.VMEM)
    flops = 2 * L * B_pad * D * D + 2 * B_pad * D * C_PAD
    bytes_accessed = (pre.size * 4 + whh_t.size * 2 + wb.size * 4
                      + B_pad * C_PAD * 4)
    logits_pad = pl.pallas_call(
        rnn_classify_kernel,
        out_shape=jax.ShapeDtypeStruct((B_pad, C_PAD), jnp.float32),
        in_specs=[vmem] * 3,
        out_specs=vmem,
        cost_estimate=pl.CostEstimate(flops=flops,
                                      transcendentals=L * B_pad * D,
                                      bytes_accessed=bytes_accessed),
    )(pre, whh_t, wb)
    # TODO(synk): at realistic batch sizes, add a "parallel" grid over B (B-tile a
    # multiple of 8) to shard across v7x's 2 TensorCores and to bound VMEM (64 MiB on
    # v7x) instead of keeping all of `pre` resident; at B<=8 a grid is pure overhead.
    return logits_pad[:B, :C]


if __name__ == "__main__":
    # Small shapes implied by the module: vocab ~ a-z + pad, sentence_length=8, vector_dim=32
    VOCAB_SIZE = 27
    SENT_LEN = 8
    VECTOR_DIM = 32
    BATCH = 2

    key = jax.random.PRNGKey(0)
    pkey, xkey = jax.random.split(key)
    params = init_params(pkey, VOCAB_SIZE, VECTOR_DIM)

    token_ids = jax.random.randint(xkey, (BATCH, SENT_LEN), 0, VOCAB_SIZE, dtype=jnp.int32)

    forward = jax.jit(torch_model_forward)
    logits = forward(token_ids, params)
    jax.block_until_ready(logits)
    assert logits.shape == (BATCH, NUM_CLASSES)
    print("KERNEL_OK")
</pallas_src>

<mosaic_0001>
module attributes {stable_mosaic.version = 11 : i64} {
  func.func @rnn_classify_kernel(%arg0: memref<8x8x32xf32, #tpu.memory_space<vmem>>, %arg1: memref<32x32xbf16, #tpu.memory_space<vmem>>, %arg2: memref<40x128xf32, #tpu.memory_space<vmem>>, %arg3: memref<8x128xf32, #tpu.memory_space<vmem>>) attributes {dimension_semantics = [], scalar_prefetch = 0 : i64, scratch_operands = 0 : i64, tpu.core_type = #tpu.core_type<tc>} {
    %c0 = arith.constant 0 : index
    %c0_0 = arith.constant 0 : index
    %0 = vector.load %arg1[%c0, %c0_0] : memref<32x32xbf16, #tpu.memory_space<vmem>>, vector<32x32xbf16>
    %cst = arith.constant 0.000000e+00 : f32
    %1 = vector.broadcast %cst : f32 to vector<8x32xf32>
    %c0_i32 = arith.constant 0 : i32
    %2 = arith.truncf %1 : vector<8x32xf32> to vector<8x32xbf16>
    %cst_1 = arith.constant dense<0.000000e+00> : vector<8x32xf32>
    %3 = tpu.matmul %2, %0, %cst_1 {dimension_numbers = #tpu.dot_dimension_numbers<[1], [0], [0], [1], [0, 0, 1, 1], [], []>} : vector<8x32xbf16>, vector<32x32xbf16>, vector<8x32xf32> -> vector<8x32xf32>
    %4 = arith.index_cast %c0_i32 : i32 to index
    %c0_2 = arith.constant 0 : index
    %c0_3 = arith.constant 0 : index
    %5 = vector.load %arg0[%4, %c0_2, %c0_3] : memref<8x8x32xf32, #tpu.memory_space<vmem>>, vector<1x8x32xf32>
    %6 = vector.shape_cast %5 : vector<1x8x32xf32> to vector<8x32xf32>
    %7 = arith.addf %6, %3 : vector<8x32xf32>
    %8 = math.tanh %7 : vector<8x32xf32>
    %c1_i32 = arith.constant 1 : i32
    %9 = arith.truncf %8 : vector<8x32xf32> to vector<8x32xbf16>
    %cst_4 = arith.constant dense<0.000000e+00> : vector<8x32xf32>
    %10 = tpu.matmul %9, %0, %cst_4 {dimension_numbers = #tpu.dot_dimension_numbers<[1], [0], [0], [1], [0, 0, 1, 1], [], []>} : vector<8x32xbf16>, vector<32x32xbf16>, vector<8x32xf32> -> vector<8x32xf32>
    %11 = arith.index_cast %c1_i32 : i32 to index
    %c0_5 = arith.constant 0 : index
    %c0_6 = arith.constant 0 : index
    %12 = vector.load %arg0[%11, %c0_5, %c0_6] : memref<8x8x32xf32, #tpu.memory_space<vmem>>, vector<1x8x32xf32>
    %13 = vector.shape_cast %12 : vector<1x8x32xf32> to vector<8x32xf32>
    %14 = arith.addf %13, %10 : vector<8x32xf32>
    %15 = math.tanh %14 : vector<8x32xf32>
    %c2_i32 = arith.constant 2 : i32
    %16 = arith.truncf %15 : vector<8x32xf32> to vector<8x32xbf16>
    %cst_7 = arith.constant dense<0.000000e+00> : vector<8x32xf32>
    %17 = tpu.matmul %16, %0, %cst_7 {dimension_numbers = #tpu.dot_dimension_numbers<[1], [0], [0], [1], [0, 0, 1, 1], [], []>} : vector<8x32xbf16>, vector<32x32xbf16>, vector<8x32xf32> -> vector<8x32xf32>
    %18 = arith.index_cast %c2_i32 : i32 to index
    %c0_8 = arith.constant 0 : index
    %c0_9 = arith.constant 0 : index
    %19 = vector.load %arg0[%18, %c0_8, %c0_9] : memref<8x8x32xf32, #tpu.memory_space<vmem>>, vector<1x8x32xf32>
    %20 = vector.shape_cast %19 : vector<1x8x32xf32> to vector<8x32xf32>
    %21 = arith.addf %20, %17 : vector<8x32xf32>
    %22 = math.tanh %21 : vector<8x32xf32>
    %c3_i32 = arith.constant 3 : i32
    %23 = arith.truncf %22 : vector<8x32xf32> to vector<8x32xbf16>
    %cst_10 = arith.constant dense<0.000000e+00> : vector<8x32xf32>
    %24 = tpu.matmul %23, %0, %cst_10 {dimension_numbers = #tpu.dot_dimension_numbers<[1], [0], [0], [1], [0, 0, 1, 1], [], []>} : vector<8x32xbf16>, vector<32x32xbf16>, vector<8x32xf32> -> vector<8x32xf32>
    %25 = arith.index_cast %c3_i32 : i32 to index
    %c0_11 = arith.constant 0 : index
    %c0_12 = arith.constant 0 : index
    %26 = vector.load %arg0[%25, %c0_11, %c0_12] : memref<8x8x32xf32, #tpu.memory_space<vmem>>, vector<1x8x32xf32>
    %27 = vector.shape_cast %26 : vector<1x8x32xf32> to vector<8x32xf32>
    %28 = arith.addf %27, %24 : vector<8x32xf32>
    %29 = math.tanh %28 : vector<8x32xf32>
    %c4_i32 = arith.constant 4 : i32
    %30 = arith.truncf %29 : vector<8x32xf32> to vector<8x32xbf16>
    %cst_13 = arith.constant dense<0.000000e+00> : vector<8x32xf32>
    %31 = tpu.matmul %30, %0, %cst_13 {dimension_numbers = #tpu.dot_dimension_numbers<[1], [0], [0], [1], [0, 0, 1, 1], [], []>} : vector<8x32xbf16>, vector<32x32xbf16>, vector<8x32xf32> -> vector<8x32xf32>
    %32 = arith.index_cast %c4_i32 : i32 to index
    %c0_14 = arith.constant 0 : index
    %c0_15 = arith.constant 0 : index
    %33 = vector.load %arg0[%32, %c0_14, %c0_15] : memref<8x8x32xf32, #tpu.memory_space<vmem>>, vector<1x8x32xf32>
    %34 = vector.shape_cast %33 : vector<1x8x32xf32> to vector<8x32xf32>
    %35 = arith.addf %34, %31 : vector<8x32xf32>
    %36 = math.tanh %35 : vector<8x32xf32>
    %c5_i32 = arith.constant 5 : i32
    %37 = arith.truncf %36 : vector<8x32xf32> to vector<8x32xbf16>
    %cst_16 = arith.constant dense<0.000000e+00> : vector<8x32xf32>
    %38 = tpu.matmul %37, %0, %cst_16 {dimension_numbers = #tpu.dot_dimension_numbers<[1], [0], [0], [1], [0, 0, 1, 1], [], []>} : vector<8x32xbf16>, vector<32x32xbf16>, vector<8x32xf32> -> vector<8x32xf32>
    %39 = arith.index_cast %c5_i32 : i32 to index
    %c0_17 = arith.constant 0 : index
    %c0_18 = arith.constant 0 : index
    %40 = vector.load %arg0[%39, %c0_17, %c0_18] : memref<8x8x32xf32, #tpu.memory_space<vmem>>, vector<1x8x32xf32>
    %41 = vector.shape_cast %40 : vector<1x8x32xf32> to vector<8x32xf32>
    %42 = arith.addf %41, %38 : vector<8x32xf32>
    %43 = math.tanh %42 : vector<8x32xf32>
    %c6_i32 = arith.constant 6 : i32
    %44 = arith.truncf %43 : vector<8x32xf32> to vector<8x32xbf16>
    %cst_19 = arith.constant dense<0.000000e+00> : vector<8x32xf32>
    %45 = tpu.matmul %44, %0, %cst_19 {dimension_numbers = #tpu.dot_dimension_numbers<[1], [0], [0], [1], [0, 0, 1, 1], [], []>} : vector<8x32xbf16>, vector<32x32xbf16>, vector<8x32xf32> -> vector<8x32xf32>
    %46 = arith.index_cast %c6_i32 : i32 to index
    %c0_20 = arith.constant 0 : index
    %c0_21 = arith.constant 0 : index
    %47 = vector.load %arg0[%46, %c0_20, %c0_21] : memref<8x8x32xf32, #tpu.memory_space<vmem>>, vector<1x8x32xf32>
    %48 = vector.shape_cast %47 : vector<1x8x32xf32> to vector<8x32xf32>
    %49 = arith.addf %48, %45 : vector<8x32xf32>
    %50 = math.tanh %49 : vector<8x32xf32>
    %c7_i32 = arith.constant 7 : i32
    %51 = arith.truncf %50 : vector<8x32xf32> to vector<8x32xbf16>
    %cst_22 = arith.constant dense<0.000000e+00> : vector<8x32xf32>
    %52 = tpu.matmul %51, %0, %cst_22 {dimension_numbers = #tpu.dot_dimension_numbers<[1], [0], [0], [1], [0, 0, 1, 1], [], []>} : vector<8x32xbf16>, vector<32x32xbf16>, vector<8x32xf32> -> vector<8x32xf32>
    %53 = arith.index_cast %c7_i32 : i32 to index
    %c0_23 = arith.constant 0 : index
    %c0_24 = arith.constant 0 : index
    %54 = vector.load %arg0[%53, %c0_23, %c0_24] : memref<8x8x32xf32, #tpu.memory_space<vmem>>, vector<1x8x32xf32>
    %55 = vector.shape_cast %54 : vector<1x8x32xf32> to vector<8x32xf32>
    %56 = arith.addf %55, %52 : vector<8x32xf32>
    %57 = math.tanh %56 : vector<8x32xf32>
    %c8_i32 = arith.constant 8 : i32
    %c0_25 = arith.constant 0 : index
    %c0_26 = arith.constant 0 : index
    %58 = vector.load %arg2[%c0_25, %c0_26] : memref<40x128xf32, #tpu.memory_space<vmem>>, vector<32x128xf32>
    %59 = arith.truncf %58 : vector<32x128xf32> to vector<32x128xbf16>
    %c32 = arith.constant 32 : index
    %c0_27 = arith.constant 0 : index
    %60 = vector.load %arg2[%c32, %c0_27] : memref<40x128xf32, #tpu.memory_space<vmem>>, vector<1x128xf32>
    %61 = arith.truncf %57 : vector<8x32xf32> to vector<8x32xbf16>
    %cst_28 = arith.constant dense<0.000000e+00> : vector<8x128xf32>
    %62 = tpu.matmul %61, %59, %cst_28 {dimension_numbers = #tpu.dot_dimension_numbers<[1], [0], [0], [1], [0, 0, 1, 1], [], []>} : vector<8x32xbf16>, vector<32x128xbf16>, vector<8x128xf32> -> vector<8x128xf32>
    %63 = vector.broadcast %60 : vector<1x128xf32> to vector<8x128xf32>
    %64 = arith.addf %62, %63 : vector<8x128xf32>
    %c0_29 = arith.constant 0 : index
    %c0_30 = arith.constant 0 : index
    %65 = vector.load %arg3[%c0_29, %c0_30] : memref<8x128xf32, #tpu.memory_space<vmem>>, vector<8x128xf32>
    tpu.vector_store %arg3[%c0_29, %c0_30], %64 {strides = array<i32>} : memref<8x128xf32, #tpu.memory_space<vmem>>, vector<8x128xf32>,
    return
  }
}

</mosaic_0001>

<llo_original>
// kernel: torch_model_forward.1
$region0: #{torch_model_forward.1}
  #allocation0 [shape = 'u32[]', space=smem, size = 0x4, offset = 0x4, fixed_abs, tag = 'smem constant byte address 0x4 - core index']
  #allocation1 [shape = 'u32[144,128]{1,0:T(1,128)}', space=vmem, size = 0x12000, scoped, tag = 'internal scratch']
  %s0 = inlined_call_operand.vmem [shape: f32[8,8,32], index: 0, kind: input, shape index: {}]
  %s1 = inlined_call_operand.vmem [shape: bf16[32,32], index: 1, kind: input, shape index: {}]
  %s2 = inlined_call_operand.vmem [shape: f32[40,128], index: 2, kind: input, shape index: {}]
  %s3 = inlined_call_operand.vmem [shape: f32[8,128], index: 3, kind: output, shape index: {}]
  %s4 = sld [smem:[#allocation0]]
  $region22: #{torch_model_forward.1} parent=0
    _
  %s6 = ssub.s32 1, %s4
  %s7 = scalar_select 0, %s6, %s4
  // Predicated region
  $region2: #{torch_model_forward.1} parent=0 // pred_check
    _
  $region3: #{torch_model_forward.1} parent=0 // pred_check_branch
    %9 = sbr.rel (0) target = $region5
  $region4: #{torch_model_forward.1} parent=0 // pred_region
    _
  $region5: #{torch_model_forward.1} parent=0 // pred_fallthru
    _
  // Predicated region
  $region6: #{torch_model_forward.1} parent=0 // pred_check
    _
  $region7: #{torch_model_forward.1} parent=0 // pred_check_branch
    %11 = sbr.rel (0) target = $region9
  $region8: #{torch_model_forward.1} parent=0 // pred_region
    _
  $region9: #{torch_model_forward.1} parent=0 // pred_fallthru
    _
  // Predicated region
  $region10: #{torch_model_forward.1} parent=0 // pred_check
    _
  $region11: #{torch_model_forward.1} parent=0 // pred_check_branch
    %13 = sbr.rel (0) target = $region13
  $region12: #{torch_model_forward.1} parent=0 // pred_region
    _
  $region13: #{torch_model_forward.1} parent=0 // pred_fallthru
    _
  %v15 = vld [vmem:[%s1] sm:$0xf]
  %v16 = vld [vmem:[%s1 + $0x4] sm:$0xf]
  %v17 = vld [vmem:[%s1 + $0x8] sm:$0xf]
  %v18 = vld [vmem:[%s1 + $0xc] sm:$0xf]
  %v23 = vunpack.c.l.b16 %v15
  %v24 = vunpack.c.l.b16 %v16
  %v25 = vunpack.c.l.b16 %v17
  %v26 = vunpack.c.l.b16 %v18
  %v27 = vpack.c.b16 %v24, %v23
  %v28 = vpack.c.b16 %v26, %v25
  %vm31 = vcmask 261120
  %v33 = vsel %vm31, 0, 0
  %35 = vmatprep.subr.bf16.mxu0 0
  %36 = vmatpush1.bf16.msra.mxu0 %v27
  %37 = vmatprep.subr.bf16.mxu0 0
  %38 = vmatpush1.bf16.msra.mxu0 %v28
  %39 = vmatprep.subr.bf16.mxu0 0
  %40 = vmatpush1.bf16.msra.mxu0 0
  %41 = vmatprep.subr.bf16.mxu0 0
  %42 = vmatpush1.bf16.msra.mxu0 0
  %43 = vmatprep.subr.bf16.mxu0 0
  %44 = vmatpush1.bf16.msra.mxu0 0
  %45 = vmatprep.subr.bf16.mxu0 0
  %46 = vmatpush1.bf16.msra.mxu0 0
  %47 = vmatprep.subr.bf16.mxu0 0
  %48 = vmatpush1.bf16.msra.mxu0 0
  %49 = vmatprep.subr.bf16.mxu0 0
  %50 = vmatpush1.bf16.msra.mxu0 0
  %51 = vmatprep.subr.bf16.mxu0 0
  %52 = vmatpush1.bf16.msra.mxu0 0
  %53 = vmatprep.subr.bf16.mxu0 0
  %54 = vmatpush1.bf16.msra.mxu0 0
  %55 = vmatprep.subr.bf16.mxu0 0
  %56 = vmatpush1.bf16.msra.mxu0 0
  %57 = vmatprep.subr.bf16.mxu0 0
  %58 = vmatpush1.bf16.msra.mxu0 0
  %59 = vmatprep.subr.bf16.mxu0 0
  %60 = vmatpush1.bf16.msra.mxu0 0
  %61 = vmatprep.subr.bf16.mxu0 0
  %62 = vmatpush1.bf16.msra.mxu0 0
  %63 = vmatprep.subr.bf16.mxu0 0
  %64 = vmatpush1.bf16.msra.mxu0 0
  %65 = vmatprep.subr.bf16.mxu0 0
  %66 = vmatpush1.bf16.msra.mxu0 0
  %67 = vmatprep.mubr.bf16.mxu0 0
  %68 = vmatmul.mubr.bf16.gmra.mrb[0].mxu0 %v33
  %v69 = vpop.f32.mrb[0].mxu0
  %v70 = vadd.f32 0.0, %v69
  %v71 = vpop.f32.mrb[0].mxu0
  %v72 = vpop.f32.mrb[0].mxu0
  %v73 = vpop.f32.mrb[0].mxu0
  %74 = vdwg.mxu0
  %v75 = vld [vmem:[%s0] sm:$0xff]
  %v76 = vadd.f32 %v75, %v70
  %v77 = vtanh.pop %v76
  %v78 = vpack.c.bf16 %v77, %v77
  %v80 = vsel %vm31, %v78, 0
  %82 = vmatprep.subr.bf16.mxu0 0
  %83 = vmatpush1.bf16.msra.mxu0 %v27
  %84 = vmatprep.subr.bf16.mxu0 0
  %85 = vmatpush1.bf16.msra.mxu0 %v28
  %86 = vmatprep.subr.bf16.mxu0 0
  %87 = vmatpush1.bf16.msra.mxu0 0
  %88 = vmatprep.subr.bf16.mxu0 0
  %89 = vmatpush1.bf16.msra.mxu0 0
  %90 = vmatprep.subr.bf16.mxu0 0
  %91 = vmatpush1.bf16.msra.mxu0 0
  %92 = vmatprep.subr.bf16.mxu0 0
  %93 = vmatpush1.bf16.msra.mxu0 0
  %94 = vmatprep.subr.bf16.mxu0 0
  %95 = vmatpush1.bf16.msra.mxu0 0
  %96 = vmatprep.subr.bf16.mxu0 0
  %97 = vmatpush1.bf16.msra.mxu0 0
  %98 = vmatprep.subr.bf16.mxu0 0
  %99 = vmatpush1.bf16.msra.mxu0 0
  %100 = vmatprep.subr.bf16.mxu0 0
  %101 = vmatpush1.bf16.msra.mxu0 0
  %102 = vmatprep.subr.bf16.mxu0 0
  %103 = vmatpush1.bf16.msra.mxu0 0
  %104 = vmatprep.subr.bf16.mxu0 0
  %105 = vmatpush1.bf16.msra.mxu0 0
  %106 = vmatprep.subr.bf16.mxu0 0
  %107 = vmatpush1.bf16.msra.mxu0 0
  %108 = vmatprep.subr.bf16.mxu0 0
  %109 = vmatpush1.bf16.msra.mxu0 0
  %110 = vmatprep.subr.bf16.mxu0 0
  %111 = vmatpush1.bf16.msra.mxu0 0
  %112 = vmatprep.subr.bf16.mxu0 0
  %113 = vmatpush1.bf16.msra.mxu0 0
  %114 = vmatprep.mubr.bf16.mxu0 0
  %115 = vmatmul.mubr.bf16.gmra.mrb[0].mxu0 %v80
  %v116 = vpop.f32.mrb[0].mxu0
  %v117 = vadd.f32 0.0, %v116
  %v118 = vpop.f32.mrb[0].mxu0
  %v119 = vpop.f32.mrb[0].mxu0
  %v120 = vpop.f32.mrb[0].mxu0
  %121 = vdwg.mxu0
  %s122 = scalar_lea.vmem %s0, 8
  %v123 = vld [vmem:[%s122] sm:$0xff]
  %v124 = vadd.f32 %v123, %v117
  %v125 = vtanh.pop %v124
  %v126 = vpack.c.bf16 %v125, %v125
  %v128 = vsel %vm31, %v126, 0
  %130 = vmatprep.subr.bf16.mxu0 0
  %131 = vmatpush1.bf16.msra.mxu0 %v27
  %132 = vmatprep.subr.bf16.mxu0 0
  %133 = vmatpush1.bf16.msra.mxu0 %v28
  %134 = vmatprep.subr.bf16.mxu0 0
  %135 = vmatpush1.bf16.msra.mxu0 0
  %136 = vmatprep.subr.bf16.mxu0 0
  %137 = vmatpush1.bf16.msra.mxu0 0
  %138 = vmatprep.subr.bf16.mxu0 0
  %139 = vmatpush1.bf16.msra.mxu0 0
  %140 = vmatprep.subr.bf16.mxu0 0
  %141 = vmatpush1.bf16.msra.mxu0 0
  %142 = vmatprep.subr.bf16.mxu0 0
  %143 = vmatpush1.bf16.msra.mxu0 0
  %144 = vmatprep.subr.bf16.mxu0 0
  %145 = vmatpush1.bf16.msra.mxu0 0
  %146 = vmatprep.subr.bf16.mxu0 0
  %147 = vmatpush1.bf16.msra.mxu0 0
  %148 = vmatprep.subr.bf16.mxu0 0
  %149 = vmatpush1.bf16.msra.mxu0 0
  %150 = vmatprep.subr.bf16.mxu0 0
  %151 = vmatpush1.bf16.msra.mxu0 0
  %152 = vmatprep.subr.bf16.mxu0 0
  %153 = vmatpush1.bf16.msra.mxu0 0
  %154 = vmatprep.subr.bf16.mxu0 0
  %155 = vmatpush1.bf16.msra.mxu0 0
  %156 = vmatprep.subr.bf16.mxu0 0
  %157 = vmatpush1.bf16.msra.mxu0 0
  %158 = vmatprep.subr.bf16.mxu0 0
  %159 = vmatpush1.bf16.msra.mxu0 0
  %160 = vmatprep.subr.bf16.mxu0 0
  %161 = vmatpush1.bf16.msra.mxu0 0
  %162 = vmatprep.mubr.bf16.mxu0 0
  %163 = vmatmul.mubr.bf16.gmra.mrb[0].mxu0 %v128
  %v164 = vpop.f32.mrb[0].mxu0
  %v165 = vadd.f32 0.0, %v164
  %v166 = vpop.f32.mrb[0].mxu0
  %v167 = vpop.f32.mrb[0].mxu0
  %v168 = vpop.f32.mrb[0].mxu0
  %169 = vdwg.mxu0
  %s170 = scalar_lea.vmem %s0, 16
  %v171 = vld [vmem:[%s170] sm:$0xff]
  %v172 = vadd.f32 %v171, %v165
  %v173 = vtanh.pop %v172
  %v174 = vpack.c.bf16 %v173, %v173
  %v176 = vsel %vm31, %v174, 0
  %178 = vmatprep.subr.bf16.mxu0 0
  %179 = vmatpush1.bf16.msra.mxu0 %v27
  %180 = vmatprep.subr.bf16.mxu0 0
  %181 = vmatpush1.bf16.msra.mxu0 %v28
  %182 = vmatprep.subr.bf16.mxu0 0
  %183 = vmatpush1.bf16.msra.mxu0 0
  %184 = vmatprep.subr.bf16.mxu0 0
  %185 = vmatpush1.bf16.msra.mxu0 0
  %186 = vmatprep.subr.bf16.mxu0 0
  %187 = vmatpush1.bf16.msra.mxu0 0
  %188 = vmatprep.subr.bf16.mxu0 0
  %189 = vmatpush1.bf16.msra.mxu0 0
  %190 = vmatprep.subr.bf16.mxu0 0
  %191 = vmatpush1.bf16.msra.mxu0 0
  %192 = vmatprep.subr.bf16.mxu0 0
  %193 = vmatpush1.bf16.msra.mxu0 0
  %194 = vmatprep.subr.bf16.mxu0 0
  %195 = vmatpush1.bf16.msra.mxu0 0
  %196 = vmatprep.subr.bf16.mxu0 0
  %197 = vmatpush1.bf16.msra.mxu0 0
  %198 = vmatprep.subr.bf16.mxu0 0
  %199 = vmatpush1.bf16.msra.mxu0 0
  %200 = vmatprep.subr.bf16.mxu0 0
  %201 = vmatpush1.bf16.msra.mxu0 0
  %202 = vmatprep.subr.bf16.mxu0 0
  %203 = vmatpush1.bf16.msra.mxu0 0
  %204 = vmatprep.subr.bf16.mxu0 0
  %205 = vmatpush1.bf16.msra.mxu0 0
  %206 = vmatprep.subr.bf16.mxu0 0
  %207 = vmatpush1.bf16.msra.mxu0 0
  %208 = vmatprep.subr.bf16.mxu0 0
  %209 = vmatpush1.bf16.msra.mxu0 0
  %210 = vmatprep.mubr.bf16.mxu0 0
  %211 = vmatmul.mubr.bf16.gmra.mrb[0].mxu0 %v176
  %v212 = vpop.f32.mrb[0].mxu0
  %v213 = vadd.f32 0.0, %v212
  %v214 = vpop.f32.mrb[0].mxu0
  %v215 = vpop.f32.mrb[0].mxu0
  %v216 = vpop.f32.mrb[0].mxu0
  %217 = vdwg.mxu0
  %s218 = scalar_lea.vmem %s0, 24
  %v219 = vld [vmem:[%s218] sm:$0xff]
  %v220 = vadd.f32 %v219, %v213
  %v221 = vtanh.pop %v220
  %v222 = vpack.c.bf16 %v221, %v221
  %v224 = vsel %vm31, %v222, 0
  %226 = vmatprep.subr.bf16.mxu0 0
  %227 = vmatpush1.bf16.msra.mxu0 %v27
  %228 = vmatprep.subr.bf16.mxu0 0
  %229 = vmatpush1.bf16.msra.mxu0 %v28
  %230 = vmatprep.subr.bf16.mxu0 0
  %231 = vmatpush1.bf16.msra.mxu0 0
  %232 = vmatprep.subr.bf16.mxu0 0
  %233 = vmatpush1.bf16.msra.mxu0 0
  %234 = vmatprep.subr.bf16.mxu0 0
  %235 = vmatpush1.bf16.msra.mxu0 0
  %236 = vmatprep.subr.bf16.mxu0 0
  %237 = vmatpush1.bf16.msra.mxu0 0
  %238 = vmatprep.subr.bf16.mxu0 0
  %239 = vmatpush1.bf16.msra.mxu0 0
  %240 = vmatprep.subr.bf16.mxu0 0
  %241 = vmatpush1.bf16.msra.mxu0 0
  %242 = vmatprep.subr.bf16.mxu0 0
  %243 = vmatpush1.bf16.msra.mxu0 0
  %244 = vmatprep.subr.bf16.mxu0 0
  %245 = vmatpush1.bf16.msra.mxu0 0
  %246 = vmatprep.subr.bf16.mxu0 0
  %247 = vmatpush1.bf16.msra.mxu0 0
  %248 = vmatprep.subr.bf16.mxu0 0
  %249 = vmatpush1.bf16.msra.mxu0 0
  %250 = vmatprep.subr.bf16.mxu0 0
  %251 = vmatpush1.bf16.msra.mxu0 0
  %252 = vmatprep.subr.bf16.mxu0 0
  %253 = vmatpush1.bf16.msra.mxu0 0
  %254 = vmatprep.subr.bf16.mxu0 0
  %255 = vmatpush1.bf16.msra.mxu0 0
  %256 = vmatprep.subr.bf16.mxu0 0
  %257 = vmatpush1.bf16.msra.mxu0 0
  %258 = vmatprep.mubr.bf16.mxu0 0
  %259 = vmatmul.mubr.bf16.gmra.mrb[0].mxu0 %v224
  %v260 = vpop.f32.mrb[0].mxu0
  %v261 = vadd.f32 0.0, %v260
  %v262 = vpop.f32.mrb[0].mxu0
  %v263 = vpop.f32.mrb[0].mxu0
  %v264 = vpop.f32.mrb[0].mxu0
  %265 = vdwg.mxu0
  %s266 = scalar_lea.vmem %s0, 32
  %v267 = vld [vmem:[%s266] sm:$0xff]
  %v268 = vadd.f32 %v267, %v261
  %v269 = vtanh.pop %v268
  %v270 = vpack.c.bf16 %v269, %v269
  %v272 = vsel %vm31, %v270, 0
  %274 = vmatprep.subr.bf16.mxu0 0
  %275 = vmatpush1.bf16.msra.mxu0 %v27
  %276 = vmatprep.subr.bf16.mxu0 0
  %277 = vmatpush1.bf16.msra.mxu0 %v28
  %278 = vmatprep.subr.bf16.mxu0 0
  %279 = vmatpush1.bf16.msra.mxu0 0
  %280 = vmatprep.subr.bf16.mxu0 0
  %281 = vmatpush1.bf16.msra.mxu0 0
  %282 = vmatprep.subr.bf16.mxu0 0
  %283 = vmatpush1.bf16.msra.mxu0 0
  %284 = vmatprep.subr.bf16.mxu0 0
  %285 = vmatpush1.bf16.msra.mxu0 0
  %286 = vmatprep.subr.bf16.mxu0 0
  %287 = vmatpush1.bf16.msra.mxu0 0
  %288 = vmatprep.subr.bf16.mxu0 0
  %289 = vmatpush1.bf16.msra.mxu0 0
  %290 = vmatprep.subr.bf16.mxu0 0
  %291 = vmatpush1.bf16.msra.mxu0 0
  %292 = vmatprep.subr.bf16.mxu0 0
  %293 = vmatpush1.bf16.msra.mxu0 0
  %294 = vmatprep.subr.bf16.mxu0 0
  %295 = vmatpush1.bf16.msra.mxu0 0
  %296 = vmatprep.subr.bf16.mxu0 0
  %297 = vmatpush1.bf16.msra.mxu0 0
  %298 = vmatprep.subr.bf16.mxu0 0
  %299 = vmatpush1.bf16.msra.mxu0 0
  %300 = vmatprep.subr.bf16.mxu0 0
  %301 = vmatpush1.bf16.msra.mxu0 0
  %302 = vmatprep.subr.bf16.mxu0 0
  %303 = vmatpush1.bf16.msra.mxu0 0
  %304 = vmatprep.subr.bf16.mxu0 0
  %305 = vmatpush1.bf16.msra.mxu0 0
  %306 = vmatprep.mubr.bf16.mxu0 0
  %307 = vmatmul.mubr.bf16.gmra.mrb[0].mxu0 %v272
  %v308 = vpop.f32.mrb[0].mxu0
  %v309 = vadd.f32 0.0, %v308
  %v310 = vpop.f32.mrb[0].mxu0
  %v311 = vpop.f32.mrb[0].mxu0
  %v312 = vpop.f32.mrb[0].mxu0
  %313 = vdwg.mxu0
  %s314 = scalar_lea.vmem %s0, 40
  %v315 = vld [vmem:[%s314] sm:$0xff]
  %v316 = vadd.f32 %v315, %v309
  %v317 = vtanh.pop %v316
  %v318 = vpack.c.bf16 %v317, %v317
  %v320 = vsel %vm31, %v318, 0
  %322 = vmatprep.subr.bf16.mxu0 0
  %323 = vmatpush1.bf16.msra.mxu0 %v27
  %324 = vmatprep.subr.bf16.mxu0 0
  %325 = vmatpush1.bf16.msra.mxu0 %v28
  %326 = vmatprep.subr.bf16.mxu0 0
  %327 = vmatpush1.bf16.msra.mxu0 0
  %328 = vmatprep.subr.bf16.mxu0 0
  %329 = vmatpush1.bf16.msra.mxu0 0
  %330 = vmatprep.subr.bf16.mxu0 0
  %331 = vmatpush1.bf16.msra.mxu0 0
  %332 = vmatprep.subr.bf16.mxu0 0
  %333 = vmatpush1.bf16.msra.mxu0 0
  %334 = vmatprep.subr.bf16.mxu0 0
  %335 = vmatpush1.bf16.msra.mxu0 0
  %336 = vmatprep.subr.bf16.mxu0 0
  %337 = vmatpush1.bf16.msra.mxu0 0
  %338 = vmatprep.subr.bf16.mxu0 0
  %339 = vmatpush1.bf16.msra.mxu0 0
  %340 = vmatprep.subr.bf16.mxu0 0
  %341 = vmatpush1.bf16.msra.mxu0 0
  %342 = vmatprep.subr.bf16.mxu0 0
  %343 = vmatpush1.bf16.msra.mxu0 0
  %344 = vmatprep.subr.bf16.mxu0 0
  %345 = vmatpush1.bf16.msra.mxu0 0
  %346 = vmatprep.subr.bf16.mxu0 0
  %347 = vmatpush1.bf16.msra.mxu0 0
  %348 = vmatprep.subr.bf16.mxu0 0
  %349 = vmatpush1.bf16.msra.mxu0 0
  %350 = vmatprep.subr.bf16.mxu0 0
  %351 = vmatpush1.bf16.msra.mxu0 0
  %352 = vmatprep.subr.bf16.mxu0 0
  %353 = vmatpush1.bf16.msra.mxu0 0
  %354 = vmatprep.mubr.bf16.mxu0 0
  %355 = vmatmul.mubr.bf16.gmra.mrb[0].mxu0 %v320
  %v356 = vpop.f32.mrb[0].mxu0
  %v357 = vadd.f32 0.0, %v356
  %v358 = vpop.f32.mrb[0].mxu0
  %v359 = vpop.f32.mrb[0].mxu0
  %v360 = vpop.f32.mrb[0].mxu0
  %361 = vdwg.mxu0
  %s362 = scalar_lea.vmem %s0, 48
  %v363 = vld [vmem:[%s362] sm:$0xff]
  %v364 = vadd.f32 %v363, %v357
  %v365 = vtanh.pop %v364
  %v366 = vpack.c.bf16 %v365, %v365
  %v368 = vsel %vm31, %v366, 0
  %370 = vmatprep.subr.bf16.mxu0 0
  %371 = vmatpush1.bf16.msra.mxu0 %v27
  %372 = vmatprep.subr.bf16.mxu0 0
  %373 = vmatpush1.bf16.msra.mxu0 %v28
  %374 = vmatprep.subr.bf16.mxu0 0
  %375 = vmatpush1.bf16.msra.mxu0 0
  %376 = vmatprep.subr.bf16.mxu0 0
  %377 = vmatpush1.bf16.msra.mxu0 0
  %378 = vmatprep.subr.bf16.mxu0 0
  %379 = vmatpush1.bf16.msra.mxu0 0
  %380 = vmatprep.subr.bf16.mxu0 0
  %381 = vmatpush1.bf16.msra.mxu0 0
  %382 = vmatprep.subr.bf16.mxu0 0
  %383 = vmatpush1.bf16.msra.mxu0 0
  %384 = vmatprep.subr.bf16.mxu0 0
  %385 = vmatpush1.bf16.msra.mxu0 0
  %386 = vmatprep.subr.bf16.mxu0 0
  %387 = vmatpush1.bf16.msra.mxu0 0
  %388 = vmatprep.subr.bf16.mxu0 0
  %389 = vmatpush1.bf16.msra.mxu0 0
  %390 = vmatprep.subr.bf16.mxu0 0
  %391 = vmatpush1.bf16.msra.mxu0 0
  %392 = vmatprep.subr.bf16.mxu0 0
  %393 = vmatpush1.bf16.msra.mxu0 0
  %394 = vmatprep.subr.bf16.mxu0 0
  %395 = vmatpush1.bf16.msra.mxu0 0
  %396 = vmatprep.subr.bf16.mxu0 0
  %397 = vmatpush1.bf16.msra.mxu0 0
  %398 = vmatprep.subr.bf16.mxu0 0
  %399 = vmatpush1.bf16.msra.mxu0 0
  %400 = vmatprep.subr.bf16.mxu0 0
  %401 = vmatpush1.bf16.msra.mxu0 0
  %402 = vmatprep.mubr.bf16.mxu0 0
  %403 = vmatmul.mubr.bf16.gmra.mrb[0].mxu0 %v368
  %v404 = vpop.f32.mrb[0].mxu0
  %v405 = vadd.f32 0.0, %v404
  %v406 = vpop.f32.mrb[0].mxu0
  %v407 = vpop.f32.mrb[0].mxu0
  %v408 = vpop.f32.mrb[0].mxu0
  %409 = vdwg.mxu0
  %s410 = scalar_lea.vmem %s0, 56
  %v411 = vld [vmem:[%s410] sm:$0xff]
  %v412 = vadd.f32 %v411, %v405
  %v413 = vtanh.pop %v412
  %v414 = vld [vmem:[%s2] sm:$0xff]
  %v415 = vld [vmem:[%s2 + $0x8] sm:$0xff]
  %v416 = vld [vmem:[%s2 + $0x10] sm:$0xff]
  %v417 = vld [vmem:[%s2 + $0x18] sm:$0xff]
  %v418 = vpack.c.bf16 %v415, %v414
  %v419 = vpack.c.bf16 %v417, %v416
  %v420 = vld [vmem:[%s2 + $0x20] sm:$0x1]
  %v421 = vpack.c.bf16 %v413, %v413
  %v422 = vlaneseq
  %v423 = vshrl.u32 %v422, 7
  %v424 = vsub.s32 0, %v423
  %v425 = vrot.slane %v420, %v424
  %v427 = vsel %vm31, %v421, 0
  %429 = vmatprep.subr.bf16.mxu0 0
  %430 = vmatpush1.bf16.msra.mxu0 %v418
  %431 = vmatprep.subr.bf16.mxu0 0
  %432 = vmatpush1.bf16.msra.mxu0 %v419
  %433 = vmatprep.subr.bf16.mxu0 0
  %434 = vmatpush1.bf16.msra.mxu0 0
  %435 = vmatprep.subr.bf16.mxu0 0
  %436 = vmatpush1.bf16.msra.mxu0 0
  %437 = vmatprep.subr.bf16.mxu0 0
  %438 = vmatpush1.bf16.msra.mxu0 0
  %439 = vmatprep.subr.bf16.mxu0 0
  %440 = vmatpush1.bf16.msra.mxu0 0
  %441 = vmatprep.subr.bf16.mxu0 0
  %442 = vmatpush1.bf16.msra.mxu0 0
  %443 = vmatprep.subr.bf16.mxu0 0
  %444 = vmatpush1.bf16.msra.mxu0 0
  %445 = vmatprep.subr.bf16.mxu0 0
  %446 = vmatpush1.bf16.msra.mxu0 0
  %447 = vmatprep.subr.bf16.mxu0 0
  %448 = vmatpush1.bf16.msra.mxu0 0
  %449 = vmatprep.subr.bf16.mxu0 0
  %450 = vmatpush1.bf16.msra.mxu0 0
  %451 = vmatprep.subr.bf16.mxu0 0
  %452 = vmatpush1.bf16.msra.mxu0 0
  %453 = vmatprep.subr.bf16.mxu0 0
  %454 = vmatpush1.bf16.msra.mxu0 0
  %455 = vmatprep.subr.bf16.mxu0 0
  %456 = vmatpush1.bf16.msra.mxu0 0
  %457 = vmatprep.subr.bf16.mxu0 0
  %458 = vmatpush1.bf16.msra.mxu0 0
  %459 = vmatprep.subr.bf16.mxu0 0
  %460 = vmatpush1.bf16.msra.mxu0 0
  %461 = vmatprep.mubr.bf16.mxu0 0
  %462 = vmatmul.mubr.bf16.gmra.mrb[0].mxu0 %v427
  %v463 = vpop.f32.mrb[0].mxu0
  %v464 = vadd.f32 %v425, %v463
  %v465 = vpop.f32.mrb[0].mxu0
  %v466 = vpop.f32.mrb[0].mxu0
  %v467 = vpop.f32.mrb[0].mxu0
  %468 = vdwg.mxu0
  %469 = vst [vmem:[%s3] sm:$0xff] %v464
  // Predicated region
  $region14: #{torch_model_forward.1} parent=0 // pred_check
    _
  $region15: #{torch_model_forward.1} parent=0 // pred_check_branch
    %471 = sbr.rel (0) target = $region17
  $region16: #{torch_model_forward.1} parent=0 // pred_region
    _
  $region17: #{torch_model_forward.1} parent=0 // pred_fallthru
    _
  // Predicated region
  $region18: #{torch_model_forward.1} parent=0 // pred_check
    _
  $region19: #{torch_model_forward.1} parent=0 // pred_check_branch
    %473 = sbr.rel (0) target = $region21
  $region20: #{torch_model_forward.1} parent=0 // pred_region
    _
  $region21: #{torch_model_forward.1} parent=0 // pred_fallthru
    _

</llo_original>
